<compile_context>
chip_gen: v7x
topology: tpu7x:2x2x1
jax: 0.10.0
libtpu: 0.0.40
codegen_flags: <defaults>
</compile_context>

<pallas_src>
import jax
import jax.numpy as jnp
from jax.experimental import pallas as pl
from jax.experimental.pallas import tpu as pltpu


# ---------------------------------------------------------------------------
# Config (stands in for `args` in the PyTorch module)
# ---------------------------------------------------------------------------
NZ = 32          # args.nz
NH = 32          # args.nh
ACTION_LEN = 3   # args.action_len  (steer, gas, brake)
ZANDH = True     # args.zandh

_MAX_TB = 4096   # batch tile cap; z/h/out tiles stay well under VMEM everywhere

# "NT" contraction: contract the last dim of both operands -> (A, TB) output.
_NT_DIMS = (((1,), (1,)), ((), ()))


def _round_up(x, m):
    return -(-x // m) * m


# ---------------------------------------------------------------------------
# Kernels (fused concat + linear + per-output activation)
# ---------------------------------------------------------------------------
def _make_single_kernel(nz, nh, zandh):
    """Single sample: z (1,nz), h (1,nh), wT (D,A), b (1,A) -> out (1,A)."""
    if zandh:
        def kernel(z_ref, h_ref, wT_ref, b_ref, out_ref):
            raw = jnp.dot(z_ref[...], wT_ref[:nz, :],
                          preferred_element_type=jnp.float32)
            raw = raw + jnp.dot(h_ref[...], wT_ref[nz:nz + nh, :],
                                preferred_element_type=jnp.float32)
            raw = raw + b_ref[...]                                   # (1, A)
            col = jax.lax.broadcasted_iota(jnp.int32, raw.shape, 1)
            # col 0 -> tanh (steer); cols 1,2 -> softplus (gas, brake)
            out_ref[...] = jnp.where(col == 0, jnp.tanh(raw),
                                     jnp.logaddexp(raw, 0.0))
    else:
        def kernel(z_ref, wT_ref, b_ref, out_ref):
            raw = jnp.dot(z_ref[...], wT_ref[...],
                          preferred_element_type=jnp.float32) + b_ref[...]
            col = jax.lax.broadcasted_iota(jnp.int32, raw.shape, 1)
            out_ref[...] = jnp.where(col == 0, jnp.tanh(raw),
                                     jnp.logaddexp(raw, 0.0))
    return kernel


def _make_batched_kernel(nz, nh, zandh):
    """Batch tile: z (TB,nz), h (TB,nh), w (A,D), b (A,1) -> out (A,TB)."""
    if zandh:
        def kernel(z_ref, h_ref, w_ref, b_ref, out_ref):
            w = w_ref[...]                                           # (A, D)
            # MXU "NT" dots: (A,nz) x (TB,nz)^T and (A,nh) x (TB,nh)^T.
            raw = jax.lax.dot_general(w[:, :nz], z_ref[...], _NT_DIMS,
                                      preferred_element_type=jnp.float32)
            raw = raw + jax.lax.dot_general(w[:, nz:nz + nh], h_ref[...],
                                            _NT_DIMS,
                                            preferred_element_type=jnp.float32)
            raw = raw + b_ref[...]                                   # (A,TB)+(A,1)
            row = jax.lax.broadcasted_iota(jnp.int32, raw.shape, 0)
            # row 0 -> tanh; rows 1,2 -> softplus.  One lane-dense store.
            out_ref[...] = jnp.where(row == 0, jnp.tanh(raw),
                                     jnp.logaddexp(raw, 0.0))
    else:
        def kernel(z_ref, w_ref, b_ref, out_ref):
            raw = jax.lax.dot_general(w_ref[...], z_ref[...], _NT_DIMS,
                                      preferred_element_type=jnp.float32)
            raw = raw + b_ref[...]
            row = jax.lax.broadcasted_iota(jnp.int32, raw.shape, 0)
            out_ref[...] = jnp.where(row == 0, jnp.tanh(raw),
                                     jnp.logaddexp(raw, 0.0))
    return kernel


# ---------------------------------------------------------------------------
# Single-sample wrapper: exact PyTorch-module semantics, returns (action_len,)
# NOTE: this path is launch/DMA-overhead-bound by construction; per-timestep
# callers should prefer controller_forward_batched or fuse into the RNN step.
# ---------------------------------------------------------------------------
def controller_forward(z, h, weight, bias):
    a_len, d = weight.shape
    # torch .squeeze() on a single sample == flatten to a row; explicit reshape
    # avoids the all-singleton-dims pitfall for (B,1,NZ)-style inputs.
    z = jnp.asarray(z, jnp.float32).reshape(1, -1)
    if ZANDH:
        assert h is not None, "You must specify h, bro"
        h = jnp.asarray(h, jnp.float32).reshape(1, -1)
        nz, nh = z.shape[1], h.shape[1]
        inputs = (z, h)
    else:
        nz, nh = z.shape[1], 0
        inputs = (z,)

    wT = weight.astype(jnp.float32).T                  # (D, A): one-time 768 B transpose
    b = bias.astype(jnp.float32).reshape(1, a_len)     # (1, A) row

    kernel = _make_single_kernel(nz, nh, ZANDH)
    n_in = len(inputs) + 2
    cost = pl.CostEstimate(
        flops=2 * d * a_len,
        transcendentals=2 * a_len,
        bytes_accessed=4 * (d + d * a_len + 2 * a_len),
    )
    out = pl.pallas_call(
        kernel,
        out_shape=jax.ShapeDtypeStruct((1, a_len), jnp.float32),   # row output, 1 store
        in_specs=[pl.BlockSpec(memory_space=pltpu.MemorySpace.VMEM)] * n_in,
        out_specs=pl.BlockSpec(memory_space=pltpu.MemorySpace.VMEM),
        cost_estimate=cost,
    )(*inputs, wT, b)
    return out.reshape(a_len)                          # (3,) = [steer, gas, brake]


# ---------------------------------------------------------------------------
# Batched wrapper: z (B,nz), h (B,nh) -> (B, action_len).
# Same per-sample math; amortizes launch/DMA overhead across rollout steps.
# ---------------------------------------------------------------------------
def controller_forward_batched(z, h, weight, bias, tb=None):
    a_len, d = weight.shape
    # bf16 inputs stay bf16 (halves HBM->VMEM bytes on v6e/v7x); else f32 (v5e-safe).
    cdt = jnp.bfloat16 if z.dtype == jnp.bfloat16 else jnp.float32
    z = z.astype(cdt)
    B = z.shape[0]
    if ZANDH:
        assert h is not None, "You must specify h, bro"
        h = h.astype(cdt)
        nz, nh = z.shape[1], h.shape[1]
    else:
        nz, nh = z.shape[1], 0

    # One grid step for typical batch sizes: per-step pipeline overhead
    # (~0.35 us) dominates this us-scale kernel; VMEM is never a constraint.
    if tb is None:
        tb = min(_MAX_TB, _round_up(B, 8))
    tb = max(8, _round_up(tb, 8))
    bp = _round_up(B, tb)
    if bp > tb:                 # multi-step: lane-dense out block needs tb % 128 == 0
        tb = _round_up(tb, 128)
        bp = _round_up(B, tb)
    # TODO(synk): on v7x, tb = bp // 2 gives two "parallel" steps that shard
    # across both TensorCores; measure before enabling (each step is overhead-bound).

    if bp != B:
        z = jnp.pad(z, ((0, bp - B), (0, 0)))
        if ZANDH:
            h = jnp.pad(h, ((0, bp - B), (0, 0)))

    w = weight.astype(cdt)                              # (A, D) -- no transpose needed
    b = bias.astype(jnp.float32).reshape(a_len, 1)      # (A, 1)

    kernel = _make_batched_kernel(nz, nh, ZANDH)
    if ZANDH:
        in_specs = [
            pl.BlockSpec((tb, nz), lambda i: (i, 0)),
            pl.BlockSpec((tb, nh), lambda i: (i, 0)),
            pl.BlockSpec((a_len, d), lambda i: (0, 0)),   # VMEM-resident weight
            pl.BlockSpec((a_len, 1), lambda i: (0, 0)),   # VMEM-resident bias
        ]
        args = (z, h, w, b)
    else:
        in_specs = [
            pl.BlockSpec((tb, nz), lambda i: (i, 0)),
            pl.BlockSpec((a_len, d), lambda i: (0, 0)),
            pl.BlockSpec((a_len, 1), lambda i: (0, 0)),
        ]
        args = (z, w, b)

    itemsize = jnp.dtype(cdt).itemsize
    cost = pl.CostEstimate(
        flops=2 * d * a_len * bp,
        transcendentals=2 * a_len * bp,
        bytes_accessed=itemsize * (bp * (nz + nh) + a_len * d)
                       + 4 * (a_len + a_len * bp),
    )
    out = pl.pallas_call(
        kernel,
        # Transposed (A, B_pad) output: batch on the 128-lane axis -> unmasked stores.
        out_shape=jax.ShapeDtypeStruct((a_len, bp), jnp.float32),
        grid_spec=pltpu.PrefetchScalarGridSpec(
            num_scalar_prefetch=0,
            grid=(bp // tb,),
            in_specs=in_specs,
            out_specs=pl.BlockSpec((a_len, tb), lambda i: (0, i)),
        ),
        compiler_params=pltpu.CompilerParams(
            dimension_semantics=("parallel",)),
        cost_estimate=cost,
    )(*args)
    return out[:, :B].T                                  # (B, action_len)


# ---------------------------------------------------------------------------
# Pure-JAX reference
# ---------------------------------------------------------------------------
def reference_forward(z, h, weight, bias):
    z = jnp.squeeze(z)
    if ZANDH:
        h = jnp.squeeze(h)
        zh = jnp.concatenate((z, h), axis=-1)
    else:
        zh = z
    raw = zh @ weight.T + bias
    steer = jnp.tanh(raw[0])
    gas = jax.nn.softplus(raw[1])
    brake = jax.nn.softplus(raw[2])
    return jnp.stack((steer, gas, brake))


if __name__ == "__main__":
    key = jax.random.PRNGKey(0)
    k_z, k_h, k_w, k_b, k_zb, k_hb = jax.random.split(key, 6)

    in_features = NZ + NH if ZANDH else NZ
    bound = in_features ** -0.5
    weight = jax.random.uniform(k_w, (ACTION_LEN, in_features),
                                minval=-bound, maxval=bound, dtype=jnp.float32)
    bias = jax.random.uniform(k_b, (ACTION_LEN,),
                              minval=-bound, maxval=bound, dtype=jnp.float32)

    # --- single-sample path (exact module semantics) ---
    z = jax.random.normal(k_z, (1, 1, NZ), dtype=jnp.float32)
    h = jax.random.normal(k_h, (1, 1, NH), dtype=jnp.float32)
    action = jax.block_until_ready(controller_forward(z, h, weight, bias))
    ref = reference_forward(z, h, weight, bias)
    assert action.shape == (ACTION_LEN,), action.shape
    assert jnp.allclose(action, ref, atol=1e-4, rtol=1e-4), (action, ref)

    # --- batched rollout path (exercises batch padding + single-step grid) ---
    B = 250
    zB = jax.random.normal(k_zb, (B, NZ), dtype=jnp.float32)
    hB = jax.random.normal(k_hb, (B, NH), dtype=jnp.float32)
    actions = jax.block_until_ready(
        controller_forward_batched(zB, hB, weight, bias))
    refB = jax.vmap(lambda zz, hh: reference_forward(zz, hh, weight, bias))(zB, hB)
    assert actions.shape == (B, ACTION_LEN), actions.shape
    assert jnp.allclose(actions, refB, atol=1e-4, rtol=1e-4), (actions, refB)

    print("KERNEL_OK")
</pallas_src>

<mosaic_0001>
module attributes {stable_mosaic.version = 11 : i64} {
  func.func @kernel(%arg0: memref<1x32xf32, #tpu.memory_space<vmem>>, %arg1: memref<1x32xf32, #tpu.memory_space<vmem>>, %arg2: memref<64x3xf32, #tpu.memory_space<vmem>>, %arg3: memref<1x3xf32, #tpu.memory_space<vmem>>, %arg4: memref<1x3xf32, #tpu.memory_space<vmem>>) attributes {dimension_semantics = [], scalar_prefetch = 0 : i64, scratch_operands = 0 : i64, tpu.core_type = #tpu.core_type<tc>} {
    %c0 = arith.constant 0 : index
    %c0_0 = arith.constant 0 : index
    %0 = vector.load %arg0[%c0, %c0_0] : memref<1x32xf32, #tpu.memory_space<vmem>>, vector<1x32xf32>
    %c0_1 = arith.constant 0 : index
    %c0_2 = arith.constant 0 : index
    %1 = vector.load %arg2[%c0_1, %c0_2] : memref<64x3xf32, #tpu.memory_space<vmem>>, vector<32x3xf32>
    %cst = arith.constant dense<0.000000e+00> : vector<1x3xf32>
    %2 = tpu.matmul %0, %1, %cst {dimension_numbers = #tpu.dot_dimension_numbers<[1], [0], [0], [1], [0, 0, 1, 1], [], []>} : vector<1x32xf32>, vector<32x3xf32>, vector<1x3xf32> -> vector<1x3xf32>
    %c0_3 = arith.constant 0 : index
    %c0_4 = arith.constant 0 : index
    %3 = vector.load %arg1[%c0_3, %c0_4] : memref<1x32xf32, #tpu.memory_space<vmem>>, vector<1x32xf32>
    %c32 = arith.constant 32 : index
    %c0_5 = arith.constant 0 : index
    %4 = vector.load %arg2[%c32, %c0_5] : memref<64x3xf32, #tpu.memory_space<vmem>>, vector<32x3xf32>
    %cst_6 = arith.constant dense<0.000000e+00> : vector<1x3xf32>
    %5 = tpu.matmul %3, %4, %cst_6 {dimension_numbers = #tpu.dot_dimension_numbers<[1], [0], [0], [1], [0, 0, 1, 1], [], []>} : vector<1x32xf32>, vector<32x3xf32>, vector<1x3xf32> -> vector<1x3xf32>
    %6 = arith.addf %2, %5 : vector<1x3xf32>
    %c0_7 = arith.constant 0 : index
    %c0_8 = arith.constant 0 : index
    %7 = vector.load %arg3[%c0_7, %c0_8] : memref<1x3xf32, #tpu.memory_space<vmem>>, vector<1x3xf32>
    %8 = arith.addf %6, %7 : vector<1x3xf32>
    %9 = tpu.iota {dimensions = array<i32: 1>} : vector<1x3xi32>
    %c0_i32 = arith.constant 0 : i32
    %10 = vector.broadcast %c0_i32 : i32 to vector<1x3xi32>
    %11 = arith.cmpi eq, %9, %10 : vector<1x3xi32>
    %12 = math.tanh %8 : vector<1x3xf32>
    %cst_9 = arith.constant 0.000000e+00 : f32
    %13 = vector.broadcast %cst_9 : f32 to vector<1x3xf32>
    %14 = arith.maximumf %8, %13 : vector<1x3xf32>
    %15 = vector.broadcast %cst_9 : f32 to vector<1x3xf32>
    %16 = arith.subf %8, %15 : vector<1x3xf32>
    %17 = arith.cmpf one, %16, %16 : vector<1x3xf32>
    %18 = vector.broadcast %cst_9 : f32 to vector<1x3xf32>
    %19 = arith.addf %8, %18 : vector<1x3xf32>
    %20 = math.absf %16 : vector<1x3xf32>
    %cst_10 = arith.constant 0.000000e+00 : f32
    %21 = vector.broadcast %cst_10 : f32 to vector<1x3xf32>
    %22 = arith.subf %21, %20 : vector<1x3xf32>
    %23 = math.exp %22 : vector<1x3xf32>
    %24 = math.log1p %23 : vector<1x3xf32>
    %25 = arith.addf %14, %24 : vector<1x3xf32>
    %26 = arith.select %17, %19, %25 : vector<1x3xi1>, vector<1x3xf32>
    %27 = arith.select %11, %12, %26 : vector<1x3xi1>, vector<1x3xf32>
    %c0_11 = arith.constant 0 : index
    %c0_12 = arith.constant 0 : index
    %28 = vector.load %arg4[%c0_11, %c0_12] : memref<1x3xf32, #tpu.memory_space<vmem>>, vector<1x3xf32>
    tpu.vector_store %arg4[%c0_11, %c0_12], %27 {strides = array<i32>} : memref<1x3xf32, #tpu.memory_space<vmem>>, vector<1x3xf32>,
    return
  }
}

</mosaic_0001>

<llo_original>
// kernel: tpu_custom_call.1
$region0: #{tpu_custom_call.1}
  #allocation0 [shape = 'u32[]', space=smem, size = 0x4, offset = 0x4, fixed_abs, tag = 'smem constant byte address 0x4 - core index']
  #allocation1 [shape = 'u32[144,128]{1,0:T(1,128)}', space=vmem, size = 0x12000, scoped, tag = 'internal scratch']
  %s0 = inlined_call_operand.vmem [shape: f32[1,32], index: 0, kind: input, shape index: {}]
  %s1 = inlined_call_operand.vmem [shape: f32[1,32], index: 1, kind: input, shape index: {}]
  %s2 = inlined_call_operand.vmem [shape: f32[64,3], index: 2, kind: input, shape index: {}]
  %s3 = inlined_call_operand.vmem [shape: f32[1,3], index: 3, kind: input, shape index: {}]
  %s4 = inlined_call_operand.hbm [shape: f32[1,3], index: 4, kind: output, shape index: {}]
  %s5 = sld [smem:[#allocation0]]
  $region26: #{tpu_custom_call.1} parent=0
    _
  %s7 = ssub.s32 1, %s5
  %s8 = scalar_select 0, %s7, %s5
  $region1: #{tpu_custom_call.1} parent=0
    #allocation2 [shape = 'u8[512]{0}', space=vmem, size = 0x400, scoped, tag = 'output window, operand 0, single buffered']
    #allocation3 [shape = 's32[1]{0}', space=sflag, size = 0x4, scoped, tag = 'scoped memory for tpu_custom_call.1']
    %9 = vsyncpa [#allocation3], 0
    // Predicated region
    $region2: #{tpu_custom_call.1} parent=1 // pred_check
      _
    $region3: #{tpu_custom_call.1} parent=1 // pred_check_branch
      %11 = sbr.rel (0) target = $region5
    $region4: #{tpu_custom_call.1} parent=1 // pred_region
      _
    $region5: #{tpu_custom_call.1} parent=1 // pred_fallthru
      _
    // Predicated region
    $region6: #{tpu_custom_call.1} parent=1 // pred_check
      _
    $region7: #{tpu_custom_call.1} parent=1 // pred_check_branch
      %13 = sbr.rel (0) target = $region9
    $region8: #{tpu_custom_call.1} parent=1 // pred_region
      _
    $region9: #{tpu_custom_call.1} parent=1 // pred_fallthru
      _
    // Predicated region
    $region10: #{tpu_custom_call.1} parent=1 // pred_check
      _
    $region11: #{tpu_custom_call.1} parent=1 // pred_check_branch
      %15 = sbr.rel (0) target = $region13
    $region12: #{tpu_custom_call.1} parent=1 // pred_region
      _
    $region13: #{tpu_custom_call.1} parent=1 // pred_fallthru
      _
    // Predicated region
    $region14: #{tpu_custom_call.1} parent=1 // pred_check
      _
    $region15: #{tpu_custom_call.1} parent=1 // pred_check_branch
      %17 = sbr.rel (0) target = $region17
    $region16: #{tpu_custom_call.1} parent=1 // pred_region
      _
    $region17: #{tpu_custom_call.1} parent=1 // pred_fallthru
      _
    %v18 = vld [vmem:[%s0] sm:$0x1]
    %v19 = vld [vmem:[%s2] sm:$0xff]
    %v20 = vld [vmem:[%s2 + $0x8] sm:$0xff]
    %v21 = vld [vmem:[%s2 + $0x10] sm:$0xff]
    %v22 = vld [vmem:[%s2 + $0x18] sm:$0xff]
    %v23 = vld [vmem:[%s1] sm:$0x1]
    %v24 = vld [vmem:[%s2 + $0x20] sm:$0xff]
    %v25 = vld [vmem:[%s2 + $0x28] sm:$0xff]
    %v26 = vld [vmem:[%s2 + $0x30] sm:$0xff]
    %v27 = vld [vmem:[%s2 + $0x38] sm:$0xff]
    %vm28 = vcmask 261120
    %v30 = vsel %vm28, %v23, 0
    %32 = vmatprep.subr.mxu0 0.0
    %33 = vmatpush1.msra.mxu0 %v24
    %34 = vmatprep.subr.mxu0 0.0
    %35 = vmatpush1.msra.mxu0 %v25
    %36 = vmatprep.subr.mxu0 0.0
    %37 = vmatpush1.msra.mxu0 %v26
    %38 = vmatprep.subr.mxu0 0.0
    %39 = vmatpush1.msra.mxu0 %v27
    %40 = vmatprep.subr.mxu0 0.0
    %41 = vmatpush1.msra.mxu0 0.0
    %42 = vmatprep.subr.mxu0 0.0
    %43 = vmatpush1.msra.mxu0 0.0
    %44 = vmatprep.subr.mxu0 0.0
    %45 = vmatpush1.msra.mxu0 0.0
    %46 = vmatprep.subr.mxu0 0.0
    %47 = vmatpush1.msra.mxu0 0.0
    %48 = vmatprep.subr.mxu0 0.0
    %49 = vmatpush1.msra.mxu0 0.0
    %50 = vmatprep.subr.mxu0 0.0
    %51 = vmatpush1.msra.mxu0 0.0
    %52 = vmatprep.subr.mxu0 0.0
    %53 = vmatpush1.msra.mxu0 0.0
    %54 = vmatprep.subr.mxu0 0.0
    %55 = vmatpush1.msra.mxu0 0.0
    %56 = vmatprep.subr.mxu0 0.0
    %57 = vmatpush1.msra.mxu0 0.0
    %58 = vmatprep.subr.mxu0 0.0
    %59 = vmatpush1.msra.mxu0 0.0
    %60 = vmatprep.subr.mxu0 0.0
    %61 = vmatpush1.msra.mxu0 0.0
    %62 = vmatprep.subr.mxu0 0.0
    %63 = vmatpush1.msra.mxu0 0.0
    %64 = vmatprep.subr.mxu0 0.0
    %65 = vmatpush1.msra.mxu0 0.0
    %66 = vmatprep.subr.mxu0 0.0
    %67 = vmatpush1.msra.mxu0 0.0
    %68 = vmatprep.subr.mxu0 0.0
    %69 = vmatpush1.msra.mxu0 0.0
    %70 = vmatprep.subr.mxu0 0.0
    %71 = vmatpush1.msra.mxu0 0.0
    %72 = vmatprep.subr.mxu0 0.0
    %73 = vmatpush1.msra.mxu0 0.0
    %74 = vmatprep.subr.mxu0 0.0
    %75 = vmatpush1.msra.mxu0 0.0
    %76 = vmatprep.subr.mxu0 0.0
    %77 = vmatpush1.msra.mxu0 0.0
    %78 = vmatprep.subr.mxu0 0.0
    %79 = vmatpush1.msra.mxu0 0.0
    %80 = vmatprep.subr.mxu0 0.0
    %81 = vmatpush1.msra.mxu0 0.0
    %82 = vmatprep.subr.mxu0 0.0
    %83 = vmatpush1.msra.mxu0 0.0
    %84 = vmatprep.subr.mxu0 0.0
    %85 = vmatpush1.msra.mxu0 0.0
    %86 = vmatprep.subr.mxu0 0.0
    %87 = vmatpush1.msra.mxu0 0.0
    %88 = vmatprep.subr.mxu0 0.0
    %89 = vmatpush1.msra.mxu0 0.0
    %90 = vmatprep.subr.mxu0 0.0
    %91 = vmatpush1.msra.mxu0 0.0
    %92 = vmatprep.subr.mxu0 0.0
    %93 = vmatpush1.msra.mxu0 0.0
    %94 = vmatprep.subr.mxu0 0.0
    %95 = vmatpush1.msra.mxu0 0.0
    %96 = vmatprep.mubr.f32.mxu0 0.0
    %97 = vmatmul.mubr.f32.gmra.mrb[0].mxu0 %v30
    %v98 = vpop.f32.mrb[0].mxu0
    %v99 = vadd.f32 0.0, %v98
    %v100 = vpop.f32.mrb[0].mxu0
    %101 = vdwg.mxu0
    %v103 = vsel %vm28, %v18, 0
    %105 = vmatprep.subr.mxu0 0.0
    %106 = vmatpush1.msra.mxu0 %v19
    %107 = vmatprep.subr.mxu0 0.0
    %108 = vmatpush1.msra.mxu0 %v20
    %109 = vmatprep.subr.mxu0 0.0
    %110 = vmatpush1.msra.mxu0 %v21
    %111 = vmatprep.subr.mxu0 0.0
    %112 = vmatpush1.msra.mxu0 %v22
    %113 = vmatprep.subr.mxu0 0.0
    %114 = vmatpush1.msra.mxu0 0.0
    %115 = vmatprep.subr.mxu0 0.0
    %116 = vmatpush1.msra.mxu0 0.0
    %117 = vmatprep.subr.mxu0 0.0
    %118 = vmatpush1.msra.mxu0 0.0
    %119 = vmatprep.subr.mxu0 0.0
    %120 = vmatpush1.msra.mxu0 0.0
    %121 = vmatprep.subr.mxu0 0.0
    %122 = vmatpush1.msra.mxu0 0.0
    %123 = vmatprep.subr.mxu0 0.0
    %124 = vmatpush1.msra.mxu0 0.0
    %125 = vmatprep.subr.mxu0 0.0
    %126 = vmatpush1.msra.mxu0 0.0
    %127 = vmatprep.subr.mxu0 0.0
    %128 = vmatpush1.msra.mxu0 0.0
    %129 = vmatprep.subr.mxu0 0.0
    %130 = vmatpush1.msra.mxu0 0.0
    %131 = vmatprep.subr.mxu0 0.0
    %132 = vmatpush1.msra.mxu0 0.0
    %133 = vmatprep.subr.mxu0 0.0
    %134 = vmatpush1.msra.mxu0 0.0
    %135 = vmatprep.subr.mxu0 0.0
    %136 = vmatpush1.msra.mxu0 0.0
    %137 = vmatprep.subr.mxu0 0.0
    %138 = vmatpush1.msra.mxu0 0.0
    %139 = vmatprep.subr.mxu0 0.0
    %140 = vmatpush1.msra.mxu0 0.0
    %141 = vmatprep.subr.mxu0 0.0
    %142 = vmatpush1.msra.mxu0 0.0
    %143 = vmatprep.subr.mxu0 0.0
    %144 = vmatpush1.msra.mxu0 0.0
    %145 = vmatprep.subr.mxu0 0.0
    %146 = vmatpush1.msra.mxu0 0.0
    %147 = vmatprep.subr.mxu0 0.0
    %148 = vmatpush1.msra.mxu0 0.0
    %149 = vmatprep.subr.mxu0 0.0
    %150 = vmatpush1.msra.mxu0 0.0
    %151 = vmatprep.subr.mxu0 0.0
    %152 = vmatpush1.msra.mxu0 0.0
    %153 = vmatprep.subr.mxu0 0.0
    %154 = vmatpush1.msra.mxu0 0.0
    %155 = vmatprep.subr.mxu0 0.0
    %156 = vmatpush1.msra.mxu0 0.0
    %157 = vmatprep.subr.mxu0 0.0
    %158 = vmatpush1.msra.mxu0 0.0
    %159 = vmatprep.subr.mxu0 0.0
    %160 = vmatpush1.msra.mxu0 0.0
    %161 = vmatprep.subr.mxu0 0.0
    %162 = vmatpush1.msra.mxu0 0.0
    %163 = vmatprep.subr.mxu0 0.0
    %164 = vmatpush1.msra.mxu0 0.0
    %165 = vmatprep.subr.mxu0 0.0
    %166 = vmatpush1.msra.mxu0 0.0
    %167 = vmatprep.subr.mxu0 0.0
    %168 = vmatpush1.msra.mxu0 0.0
    %169 = vmatprep.mubr.f32.mxu0 0.0
    %170 = vmatmul.mubr.f32.gmra.mrb[0].mxu0 %v103
    %v171 = vpop.f32.mrb[0].mxu0
    %v172 = vadd.f32 %v99, %v171
    %v173 = vpop.f32.mrb[0].mxu0
    %174 = vdwg.mxu0
    %v175 = vld [vmem:[%s3] sm:$0x1]
    %v176 = vadd.f32 %v172, %v175
    %v177 = vlaneseq
    %v178 = vand.u32 %v177, 127
    %vm179 = vcmp.eq.s32.totalorder %v178, 0
    %v180 = vtanh.pop %v176
    %v181 = vmax.f32 %v176, 0.0
    %vm182 = vcmp.ne.f32.partialorder %v176, %v176
    %v183 = vadd.f32 %v176, 0.0
    %v184 = vand.u32 2147483647, %v176
    %v185 = vsub.f32 0.0, %v184
    %v186 = vmul.f32 %v185, 1.442695
    %v187 = vpow.pop %v186
    %v188 = vadd.f32 %v187, 1.0
    %v189 = vlog2.pop %v188
    %v190 = vmul.f32 %v189, 0.6931472
    %v191 = vmul.f32 -0.5, %v187
    %v192 = vadd.f32 %v191, 1.0
    %v193 = vmul.f32 %v192, %v187
    %v194 = vand.u32 2147483647, %v187
    %vm195 = vcmp.lt.f32.partialorder %v194, 0.0004427343
    %v196 = vsel %vm195, %v193, %v190
    %v197 = vadd.f32 %v181, %v196
    %v198 = vsel %vm182, %v183, %v197
    %v199 = vsel %vm179, %v180, %v198
    %vm200 = vcmask 16384
    %201 = vst.msk [vmem:[#allocation2] sm:$0x1] %vm200, %v199
    // Predicated region
    $region18: #{tpu_custom_call.1} parent=1 // pred_check
      _
    $region19: #{tpu_custom_call.1} parent=1 // pred_check_branch
      %203 = sbr.rel (0) target = $region21
    $region20: #{tpu_custom_call.1} parent=1 // pred_region
      %s205 = ssub.s32 16, 16
      %206 = vsyncadd [#allocation3], %s205
      %s208 = sshll.u32 [#allocation2], 4
      %s209 = int_to_ptr.vmem [resolvable:$true] %s208
      %211 = dma.vmem_to_hbm [thread:$0]  %s209, 16, %s4, [#allocation3]
    $region21: #{tpu_custom_call.1} parent=1 // pred_fallthru
      _
    // Predicated region
    $region22: #{tpu_custom_call.1} parent=1 // pred_check
      _
    $region23: #{tpu_custom_call.1} parent=1 // pred_check_branch
      %213 = sbr.rel (0) target = $region25
    $region24: #{tpu_custom_call.1} parent=1 // pred_region
      %214 = dma.done [#allocation3], 16
    $region25: #{tpu_custom_call.1} parent=1 // pred_fallthru
      _
    %215 = vsyncpa [#allocation3], 1

</llo_original>
